<compile_context>
chip_gen: v6e
topology: v6e:2x2x1
jax: 0.10.0
libtpu: 0.0.40
codegen_flags: <defaults>
</compile_context>

<pallas_src>
import jax
import jax.numpy as jnp
from jax.experimental import pallas as pl
from jax.experimental.pallas import tpu as pltpu

HIDDEN = 64  # per-head hidden width (fused hidden = 2 * HIDDEN = 128)
_HP = jax.lax.Precision.HIGHEST


def _critic_fused_kernel(x_ref, w1_ref, b1_ref, w2_ref, b2_ref, q_ref):
    # x: (TILE_B, obs_dim)  w1: (obs_dim, 128)  w2: (128, 2A) block-diagonal.
    x = x_ref[...]
    h = jnp.tanh(
        jnp.dot(x, w1_ref[...], preferred_element_type=jnp.float32, precision=_HP)
        + b1_ref[...]
    )
    q = (
        jnp.dot(h, w2_ref[...], preferred_element_type=jnp.float32, precision=_HP)
        + b2_ref[...]
    )
    q_ref[...] = q.astype(q_ref.dtype)


def init_critic_params(key, obs_dim, action_dim):
    """Deterministic init mimicking PyTorch Linear default:
    U(-1/sqrt(fan_in), 1/sqrt(fan_in)). Weights stored as (in, out)."""
    ks = jax.random.split(key, 8)

    def lin(kw, kb, fan_in, fan_out):
        bound = 1.0 / jnp.sqrt(float(fan_in))
        w = jax.random.uniform(kw, (fan_in, fan_out), jnp.float32, -bound, bound)
        b = jax.random.uniform(kb, (1, fan_out), jnp.float32, -bound, bound)
        return w, b

    w1a, b1a = lin(ks[0], ks[1], obs_dim, HIDDEN)
    w2a, b2a = lin(ks[2], ks[3], HIDDEN, action_dim)
    w1b, b1b = lin(ks[4], ks[5], obs_dim, HIDDEN)
    w2b, b2b = lin(ks[6], ks[7], HIDDEN, action_dim)
    return dict(w1a=w1a, b1a=b1a, w2a=w2a, b2a=b2a,
                w1b=w1b, b1b=b1b, w2b=w2b, b2b=b2b)


def fuse_critic_params(p):
    """One-time fusion of the twin heads (done outside the kernel / hot loop)."""
    H = p["w2a"].shape[0]
    A = p["w2a"].shape[1]
    w1 = jnp.concatenate([p["w1a"], p["w1b"]], axis=1)            # (obs_dim, 2H)
    b1 = jnp.concatenate([p["b1a"], p["b1b"]], axis=1)            # (1, 2H)
    w2 = jnp.zeros((2 * H, 2 * A), jnp.float32)                   # block-diagonal
    w2 = w2.at[:H, :A].set(p["w2a"]).at[H:, A:].set(p["w2b"])     # (2H, 2A)
    b2 = jnp.concatenate([p["b2a"], p["b2b"]], axis=1)            # (1, 2A)
    return dict(w1=w1, b1=b1, w2=w2, b2=b2)


# ---------------------------------------------------------------------------
# VMEM accounting with lane/sublane padding and generation-aware caps.
# ---------------------------------------------------------------------------
def _vmem_capacity_bytes():
    """Per-TensorCore physical VMEM; conservative 64 MiB (v7x) fallback."""
    try:
        info = pltpu.get_tpu_info()
        cap = getattr(info, "vmem_capacity_bytes", None)
        if cap:
            return int(cap)
    except Exception:
        pass
    return 64 * 1024 * 1024


def _padded_bytes(shape, itemsize=4):
    """Bytes a VMEM-resident f32 buffer really occupies: last dim rounded up
    to 128 lanes, second-to-last to 8 sublanes."""
    if len(shape) == 1:
        shape = (1,) + tuple(shape)
    sub, lane = shape[-2], shape[-1]
    sub = ((sub + 7) // 8) * 8
    lane = ((lane + 127) // 128) * 128
    n = sub * lane
    for d in shape[:-2]:
        n *= d
    return n * itemsize


def _vmem_bytes_estimate(tile_b, obs_dim, h2, a2):
    dbl = 2  # BlockSpec double-buffers every operand
    est = 0
    est += dbl * _padded_bytes((tile_b, obs_dim))   # x tile
    est += dbl * _padded_bytes((tile_b, a2))        # q tile (output)
    est += dbl * _padded_bytes((obs_dim, h2))       # W1
    est += dbl * _padded_bytes((1, h2))             # b1
    est += dbl * _padded_bytes((h2, a2))            # W2 (block-diagonal)
    est += dbl * _padded_bytes((1, a2))             # b2
    est += _padded_bytes((tile_b, h2))              # hidden activations (temps)
    return est


def _select_tile(B, vmem_cap):
    """Large batch tiles to amortize per-grid-step overhead, multiple of 8,
    generation-aware ceiling, and >=2 tiles when there is enough work so the
    two v7x TensorCores both get batch tiles."""
    max_tile = 2048 if vmem_cap <= 64 * 1024 * 1024 else 4096
    b8 = max(8, ((B + 7) // 8) * 8)
    tile_b = min(b8, max_tile)
    if tile_b == b8 and b8 >= 2048:
        # Whole batch would fit in one step but it is big: split into two
        # tiles (>=1024 rows each) so megacore sharding has work for both TCs.
        tile_b = ((b8 // 2 + 7) // 8) * 8
    return tile_b


def critic_forward(x, fused):
    """x: (B, obs_dim) f32.  fused: output of fuse_critic_params.
    Returns (q1, q2), each (B, action_dim)."""
    B, obs_dim = x.shape
    H2 = fused["w1"].shape[1]          # 128
    A2 = fused["w2"].shape[1]          # 2 * action_dim
    A = A2 // 2

    vmem_cap = _vmem_capacity_bytes()
    tile_b = _select_tile(B, vmem_cap)
    grid = (pl.cdiv(B, tile_b),)       # ragged tail handled by Pallas masking

    est = _vmem_bytes_estimate(tile_b, obs_dim, H2, A2)
    vmem_limit = int(min(int(0.75 * vmem_cap), max(16 * 1024 * 1024, 2 * est)))

    q = pl.pallas_call(
        _critic_fused_kernel,
        out_shape=jax.ShapeDtypeStruct((B, A2), jnp.float32),
        grid=grid,
        in_specs=[
            pl.BlockSpec((tile_b, obs_dim), lambda i: (i, 0)),   # x: batch-tiled
            pl.BlockSpec((obs_dim, H2), lambda i: (0, 0)),       # W1: resident
            pl.BlockSpec((1, H2), lambda i: (0, 0)),             # b1
            pl.BlockSpec((H2, A2), lambda i: (0, 0)),            # W2 (block-diag)
            pl.BlockSpec((1, A2), lambda i: (0, 0)),             # b2
        ],
        out_specs=pl.BlockSpec((tile_b, A2), lambda i: (i, 0)),  # [q1 | q2]
        compiler_params=pltpu.CompilerParams(
            dimension_semantics=("parallel",),   # megacore-shard batch tiles
            vmem_limit_bytes=vmem_limit,
        ),
    )(x, fused["w1"], fused["b1"], fused["w2"], fused["b2"])

    q1 = q[:, :A]
    q2 = q[:, A:]
    return q1, q2


def critic_reference(x, p):
    """Pure-JAX reference at HIGHEST precision (matches the f32 PyTorch spec)."""
    h1 = jnp.tanh(jnp.dot(x, p["w1a"], precision=_HP) + p["b1a"])
    q1 = jnp.dot(h1, p["w2a"], precision=_HP) + p["b2a"]
    h2 = jnp.tanh(jnp.dot(x, p["w1b"], precision=_HP) + p["b1b"])
    q2 = jnp.dot(h2, p["w2b"], precision=_HP) + p["b2b"]
    return q1, q2


if __name__ == "__main__":
    key = jax.random.PRNGKey(0)
    k_x, k_p = jax.random.split(key)

    batch, obs_dim, action_dim = 8, 32, 4
    x = jax.random.normal(k_x, (batch, obs_dim), jnp.float32)
    params = init_critic_params(k_p, obs_dim, action_dim)
    fused = fuse_critic_params(params)   # done once, outside the hot path

    q1, q2 = jax.jit(critic_forward)(x, fused)
    q1 = jax.block_until_ready(q1)
    q2 = jax.block_until_ready(q2)

    q1_ref, q2_ref = critic_reference(x, params)
    assert q1.shape == (batch, action_dim) and q2.shape == (batch, action_dim)
    assert jnp.allclose(q1, q1_ref, atol=1e-5, rtol=1e-5)
    assert jnp.allclose(q2, q2_ref, atol=1e-5, rtol=1e-5)

    print("KERNEL_OK")
</pallas_src>

<mosaic_0001>
module attributes {stable_mosaic.version = 11 : i64} {
  func.func @_critic_fused_kernel(%arg0: i32, %arg1: memref<8x32xf32, #tpu.memory_space<vmem>>, %arg2: memref<32x128xf32, #tpu.memory_space<vmem>>, %arg3: memref<1x128xf32, #tpu.memory_space<vmem>>, %arg4: memref<128x8xf32, #tpu.memory_space<vmem>>, %arg5: memref<1x8xf32, #tpu.memory_space<vmem>>, %arg6: memref<8x8xf32, #tpu.memory_space<vmem>>) attributes {dimension_semantics = [#tpu.dimension_semantics<parallel>], iteration_bounds = array<i64: 1>, scalar_prefetch = 0 : i64, scratch_operands = 0 : i64, tpu.core_type = #tpu.core_type<tc>, window_params = [{transform_indices = @transform_0, window_bounds = array<i64: 8, 32>}, {pipeline_mode = #tpu.pipeline_mode<synchronous>, transform_indices = @transform_1, window_bounds = array<i64: 32, 128>}, {pipeline_mode = #tpu.pipeline_mode<synchronous>, transform_indices = @transform_2, window_bounds = array<i64: 1, 128>}, {pipeline_mode = #tpu.pipeline_mode<synchronous>, transform_indices = @transform_3, window_bounds = array<i64: 128, 8>}, {pipeline_mode = #tpu.pipeline_mode<synchronous>, transform_indices = @transform_4, window_bounds = array<i64: 1, 8>}, {transform_indices = @transform_5, window_bounds = array<i64: 8, 8>}]} {
    %c0 = arith.constant 0 : index
    %c0_0 = arith.constant 0 : index
    %0 = vector.load %arg1[%c0, %c0_0] : memref<8x32xf32, #tpu.memory_space<vmem>>, vector<8x32xf32>
    %c0_1 = arith.constant 0 : index
    %c0_2 = arith.constant 0 : index
    %1 = vector.load %arg2[%c0_1, %c0_2] : memref<32x128xf32, #tpu.memory_space<vmem>>, vector<32x128xf32>
    %cst = arith.constant dense<0.000000e+00> : vector<8x128xf32>
    %2 = tpu.matmul %0, %1, %cst {dimension_numbers = #tpu.dot_dimension_numbers<[1], [0], [0], [1], [0, 0, 1, 1], [], []>, precision = #tpu.contract_precision<fp32>} : vector<8x32xf32>, vector<32x128xf32>, vector<8x128xf32> -> vector<8x128xf32>
    %c0_3 = arith.constant 0 : index
    %c0_4 = arith.constant 0 : index
    %3 = vector.load %arg3[%c0_3, %c0_4] : memref<1x128xf32, #tpu.memory_space<vmem>>, vector<1x128xf32>
    %4 = vector.broadcast %3 : vector<1x128xf32> to vector<8x128xf32>
    %5 = arith.addf %2, %4 : vector<8x128xf32>
    %6 = math.tanh %5 : vector<8x128xf32>
    %c0_5 = arith.constant 0 : index
    %c0_6 = arith.constant 0 : index
    %7 = vector.load %arg4[%c0_5, %c0_6] : memref<128x8xf32, #tpu.memory_space<vmem>>, vector<128x8xf32>
    %cst_7 = arith.constant dense<0.000000e+00> : vector<8x8xf32>
    %8 = tpu.matmul %6, %7, %cst_7 {dimension_numbers = #tpu.dot_dimension_numbers<[1], [0], [0], [1], [0, 0, 1, 1], [], []>, precision = #tpu.contract_precision<fp32>} : vector<8x128xf32>, vector<128x8xf32>, vector<8x8xf32> -> vector<8x8xf32>
    %c0_8 = arith.constant 0 : index
    %c0_9 = arith.constant 0 : index
    %9 = vector.load %arg5[%c0_8, %c0_9] : memref<1x8xf32, #tpu.memory_space<vmem>>, vector<1x8xf32>
    %10 = vector.broadcast %9 : vector<1x8xf32> to vector<8x8xf32>
    %11 = arith.addf %8, %10 : vector<8x8xf32>
    %c0_10 = arith.constant 0 : index
    %c0_11 = arith.constant 0 : index
    %12 = vector.load %arg6[%c0_10, %c0_11] : memref<8x8xf32, #tpu.memory_space<vmem>>, vector<8x8xf32>
    tpu.vector_store %arg6[%c0_10, %c0_11], %11 {strides = array<i32>} : memref<8x8xf32, #tpu.memory_space<vmem>>, vector<8x8xf32>,
    return
  }
  func.func @transform_0(%arg0: i32) -> (i32, i32) {
    %c0_i32 = arith.constant 0 : i32
    %c0_i32_0 = arith.constant 0 : i32
    return %arg0, %c0_i32 : i32, i32
  }
  func.func @transform_1(%arg0: i32) -> (i32, i32) {
    %c0_i32 = arith.constant 0 : i32
    %c0_i32_0 = arith.constant 0 : i32
    %c0_i32_1 = arith.constant 0 : i32
    return %c0_i32, %c0_i32_0 : i32, i32
  }
  func.func @transform_2(%arg0: i32) -> (i32, i32) {
    %c0_i32 = arith.constant 0 : i32
    %c0_i32_0 = arith.constant 0 : i32
    %c0_i32_1 = arith.constant 0 : i32
    return %c0_i32, %c0_i32_0 : i32, i32
  }
  func.func @transform_3(%arg0: i32) -> (i32, i32) {
    %c0_i32 = arith.constant 0 : i32
    %c0_i32_0 = arith.constant 0 : i32
    %c0_i32_1 = arith.constant 0 : i32
    return %c0_i32, %c0_i32_0 : i32, i32
  }
  func.func @transform_4(%arg0: i32) -> (i32, i32) {
    %c0_i32 = arith.constant 0 : i32
    %c0_i32_0 = arith.constant 0 : i32
    %c0_i32_1 = arith.constant 0 : i32
    return %c0_i32, %c0_i32_0 : i32, i32
  }
  func.func @transform_5(%arg0: i32) -> (i32, i32) {
    %c0_i32 = arith.constant 0 : i32
    %c0_i32_0 = arith.constant 0 : i32
    return %arg0, %c0_i32 : i32, i32
  }
}

</mosaic_0001>

<llo_original>
// kernel: critic_forward.1
$region0: #{critic_forward.1}
  #allocation0 [shape = 'u32[]', space=smem, size = 0x4, offset = 0x4, fixed_abs, tag = 'smem constant byte address 0x4 - core index']
  #allocation1 [shape = 'u32[144,128]{1,0:T(1,128)}', space=vmem, size = 0x12000, scoped, tag = 'internal scratch']
  %s0 = inlined_call_operand.vmem [shape: f32[8,32], index: 0, kind: input, shape index: {}]
  %s1 = inlined_call_operand.vmem [shape: f32[32,128], index: 1, kind: input, shape index: {}]
  %s2 = inlined_call_operand.vmem [shape: f32[1,128], index: 2, kind: input, shape index: {}]
  %s3 = inlined_call_operand.vmem [shape: f32[128,8], index: 3, kind: input, shape index: {}]
  %s4 = inlined_call_operand.vmem [shape: f32[1,8], index: 4, kind: input, shape index: {}]
  %s5 = inlined_call_operand.vmem [shape: f32[8,8], index: 5, kind: output, shape index: {}]
  %s6 = sld [smem:[#allocation0]]
  $region30: #{critic_forward.1} parent=0
    _
  %s8 = ssub.s32 1, %s6
  %s9 = scalar_select 0, %s8, %s6
  // Predicated region
  $region2: #{critic_forward.1} parent=0 // pred_check
    _
  $region3: #{critic_forward.1} parent=0 // pred_check_branch
    %11 = sbr.rel (0) target = $region5
  $region4: #{critic_forward.1} parent=0 // pred_region
    _
  $region5: #{critic_forward.1} parent=0 // pred_fallthru
    _
  // Predicated region
  $region6: #{critic_forward.1} parent=0 // pred_check
    _
  $region7: #{critic_forward.1} parent=0 // pred_check_branch
    %13 = sbr.rel (0) target = $region9
  $region8: #{critic_forward.1} parent=0 // pred_region
    _
  $region9: #{critic_forward.1} parent=0 // pred_fallthru
    _
  // Predicated region
  $region10: #{critic_forward.1} parent=0 // pred_check
    _
  $region11: #{critic_forward.1} parent=0 // pred_check_branch
    %15 = sbr.rel (0) target = $region13
  $region12: #{critic_forward.1} parent=0 // pred_region
    _
  $region13: #{critic_forward.1} parent=0 // pred_fallthru
    _
  // Predicated region
  $region14: #{critic_forward.1} parent=0 // pred_check
    _
  $region15: #{critic_forward.1} parent=0 // pred_check_branch
    %17 = sbr.rel (0) target = $region17
  $region16: #{critic_forward.1} parent=0 // pred_region
    _
  $region17: #{critic_forward.1} parent=0 // pred_fallthru
    _
  // Predicated region
  $region18: #{critic_forward.1} parent=0 // pred_check
    _
  $region19: #{critic_forward.1} parent=0 // pred_check_branch
    %19 = sbr.rel (0) target = $region21
  $region20: #{critic_forward.1} parent=0 // pred_region
    _
  $region21: #{critic_forward.1} parent=0 // pred_fallthru
    _
  %v20 = vld [vmem:[%s0] sm:$0xff]
  %v21 = vld [vmem:[%s1] sm:$0xff]
  %v22 = vld [vmem:[%s1 + $0x8] sm:$0xff]
  %v23 = vld [vmem:[%s1 + $0x10] sm:$0xff]
  %v24 = vld [vmem:[%s1 + $0x18] sm:$0xff]
  %v25 = vld [vmem:[%s2] sm:$0x1]
  %v27 = vlaneseq
  %v28 = vshrl.u32 %v27, 7
  %v29 = vsub.s32 0, %v28
  %v30 = vrot.slane %v25, %v29
  %vm32 = vcmask 261120
  %v34 = vsel %vm32, %v20, 0
  %36 = vmatprep.subr.mxu0 0.0
  %37 = vmatpush1.msra.mxu0 0.0
  %38 = vmatprep.subr.mxu0 0.0
  %39 = vmatpush1.msra.mxu0 0.0
  %40 = vmatprep.subr.mxu0 0.0
  %41 = vmatpush1.msra.mxu0 0.0
  %42 = vmatprep.subr.mxu0 0.0
  %43 = vmatpush1.msra.mxu0 0.0
  %44 = vmatprep.subr.mxu0 0.0
  %45 = vmatpush1.msra.mxu0 0.0
  %46 = vmatprep.subr.mxu0 0.0
  %47 = vmatpush1.msra.mxu0 0.0
  %48 = vmatprep.subr.mxu0 0.0
  %49 = vmatpush1.msra.mxu0 0.0
  %50 = vmatprep.subr.mxu0 0.0
  %51 = vmatpush1.msra.mxu0 0.0
  %52 = vmatprep.subr.mxu0 0.0
  %53 = vmatpush1.msra.mxu0 0.0
  %54 = vmatprep.subr.mxu0 0.0
  %55 = vmatpush1.msra.mxu0 0.0
  %56 = vmatprep.subr.mxu0 0.0
  %57 = vmatpush1.msra.mxu0 0.0
  %58 = vmatprep.subr.mxu0 0.0
  %59 = vmatpush1.msra.mxu0 0.0
  %60 = vmatprep.subr.mxu0 0.0
  %v61 = vand.u32 %v24, 4294901760
  %62 = vmatpush1.msra.mxu0 %v61
  %63 = vmatprep.subr.mxu0 0.0
  %v64 = vand.u32 %v23, 4294901760
  %65 = vmatpush1.msra.mxu0 %v64
  %66 = vmatprep.subr.mxu0 0.0
  %v67 = vand.u32 %v22, 4294901760
  %68 = vmatpush1.msra.mxu0 %v67
  %69 = vmatprep.subr.mxu0 0.0
  %v70 = vand.u32 %v21, 4294901760
  %71 = vmatpush1.msra.mxu0 %v70
  %72 = vmatprep.subr.mxu0 0.0
  %73 = vmatpush2.msra.mxu0 0.0
  %74 = vmatprep.subr.mxu0 0.0
  %75 = vmatpush2.msra.mxu0 0.0
  %76 = vmatprep.subr.mxu0 0.0
  %77 = vmatpush2.msra.mxu0 0.0
  %78 = vmatprep.subr.mxu0 0.0
  %79 = vmatpush2.msra.mxu0 0.0
  %80 = vmatprep.subr.mxu0 0.0
  %81 = vmatpush2.msra.mxu0 0.0
  %82 = vmatprep.subr.mxu0 0.0
  %83 = vmatpush2.msra.mxu0 0.0
  %84 = vmatprep.subr.mxu0 0.0
  %85 = vmatpush2.msra.mxu0 0.0
  %86 = vmatprep.subr.mxu0 0.0
  %87 = vmatpush2.msra.mxu0 0.0
  %88 = vmatprep.subr.mxu0 0.0
  %89 = vmatpush2.msra.mxu0 0.0
  %90 = vmatprep.subr.mxu0 0.0
  %91 = vmatpush2.msra.mxu0 0.0
  %92 = vmatprep.subr.mxu0 0.0
  %93 = vmatpush2.msra.mxu0 0.0
  %94 = vmatprep.subr.mxu0 0.0
  %95 = vmatpush2.msra.mxu0 0.0
  %96 = vmatprep.subr.mxu0 0.0
  %97 = vmatpush2.msra.mxu0 0.0
  %98 = vmatprep.subr.mxu0 0.0
  %99 = vmatpush2.msra.mxu0 0.0
  %100 = vmatprep.subr.mxu0 0.0
  %101 = vmatpush2.msra.mxu0 0.0
  %102 = vmatprep.subr.mxu0 0.0
  %103 = vmatpush2.msra.mxu0 0.0
  %104 = vmatprep.mubr.f32.mxu0 0.0
  %v105 = vand.u32 %v34, 4294901760
  %v106 = vsub.f32 %v34, %v105
  %v107 = vand.u32 %v106, 4294901760
  %v108 = vsub.f32 %v106, %v107
  %v109 = vand.u32 %v108, 4294901760
  %110 = vmatmul.mubr.f32.gmra.mxu0 %v109
  %v111 = vpop.f32.mrf.mxu0
  %v112 = vadd.f32 %v30, %v111
  %v113 = vpop.f32.mrf.mxu0
  %114 = vdwg.mxu0
  %115 = vmatprep.subr.mxu0 0.0
  %116 = vmatpush1.msra.mxu0 0.0
  %117 = vmatprep.subr.mxu0 0.0
  %118 = vmatpush1.msra.mxu0 0.0
  %119 = vmatprep.subr.mxu0 0.0
  %120 = vmatpush1.msra.mxu0 0.0
  %121 = vmatprep.subr.mxu0 0.0
  %122 = vmatpush1.msra.mxu0 0.0
  %123 = vmatprep.subr.mxu0 0.0
  %124 = vmatpush1.msra.mxu0 0.0
  %125 = vmatprep.subr.mxu0 0.0
  %126 = vmatpush1.msra.mxu0 0.0
  %127 = vmatprep.subr.mxu0 0.0
  %128 = vmatpush1.msra.mxu0 0.0
  %129 = vmatprep.subr.mxu0 0.0
  %130 = vmatpush1.msra.mxu0 0.0
  %131 = vmatprep.subr.mxu0 0.0
  %132 = vmatpush1.msra.mxu0 0.0
  %133 = vmatprep.subr.mxu0 0.0
  %134 = vmatpush1.msra.mxu0 0.0
  %135 = vmatprep.subr.mxu0 0.0
  %136 = vmatpush1.msra.mxu0 0.0
  %137 = vmatprep.subr.mxu0 0.0
  %138 = vmatpush1.msra.mxu0 0.0
  %139 = vmatprep.subr.mxu0 0.0
  %v140 = vand.u32 %v24, 4294901760
  %v141 = vsub.f32 %v24, %v140
  %v142 = vand.u32 %v141, 4294901760
  %v143 = vsub.f32 %v141, %v142
  %v144 = vand.u32 %v143, 4294901760
  %145 = vmatpush1.msra.mxu0 %v144
  %146 = vmatprep.subr.mxu0 0.0
  %v147 = vand.u32 %v23, 4294901760
  %v148 = vsub.f32 %v23, %v147
  %v149 = vand.u32 %v148, 4294901760
  %v150 = vsub.f32 %v148, %v149
  %v151 = vand.u32 %v150, 4294901760
  %152 = vmatpush1.msra.mxu0 %v151
  %153 = vmatprep.subr.mxu0 0.0
  %v154 = vand.u32 %v22, 4294901760
  %v155 = vsub.f32 %v22, %v154
  %v156 = vand.u32 %v155, 4294901760
  %v157 = vsub.f32 %v155, %v156
  %v158 = vand.u32 %v157, 4294901760
  %159 = vmatpush1.msra.mxu0 %v158
  %160 = vmatprep.subr.mxu0 0.0
  %v161 = vand.u32 %v21, 4294901760
  %v162 = vsub.f32 %v21, %v161
  %v163 = vand.u32 %v162, 4294901760
  %v164 = vsub.f32 %v162, %v163
  %v165 = vand.u32 %v164, 4294901760
  %166 = vmatpush1.msra.mxu0 %v165
  %167 = vmatprep.subr.mxu0 0.0
  %168 = vmatpush2.msra.mxu0 0.0
  %169 = vmatprep.subr.mxu0 0.0
  %170 = vmatpush2.msra.mxu0 0.0
  %171 = vmatprep.subr.mxu0 0.0
  %172 = vmatpush2.msra.mxu0 0.0
  %173 = vmatprep.subr.mxu0 0.0
  %174 = vmatpush2.msra.mxu0 0.0
  %175 = vmatprep.subr.mxu0 0.0
  %176 = vmatpush2.msra.mxu0 0.0
  %177 = vmatprep.subr.mxu0 0.0
  %178 = vmatpush2.msra.mxu0 0.0
  %179 = vmatprep.subr.mxu0 0.0
  %180 = vmatpush2.msra.mxu0 0.0
  %181 = vmatprep.subr.mxu0 0.0
  %182 = vmatpush2.msra.mxu0 0.0
  %183 = vmatprep.subr.mxu0 0.0
  %184 = vmatpush2.msra.mxu0 0.0
  %185 = vmatprep.subr.mxu0 0.0
  %186 = vmatpush2.msra.mxu0 0.0
  %187 = vmatprep.subr.mxu0 0.0
  %188 = vmatpush2.msra.mxu0 0.0
  %189 = vmatprep.subr.mxu0 0.0
  %190 = vmatpush2.msra.mxu0 0.0
  %191 = vmatprep.subr.mxu0 0.0
  %192 = vmatpush2.msra.mxu0 0.0
  %193 = vmatprep.subr.mxu0 0.0
  %194 = vmatpush2.msra.mxu0 0.0
  %195 = vmatprep.subr.mxu0 0.0
  %196 = vmatpush2.msra.mxu0 0.0
  %197 = vmatprep.subr.mxu0 0.0
  %198 = vmatpush2.msra.mxu0 0.0
  %199 = vmatprep.mubr.f32.mxu0 0.0
  %v200 = vand.u32 %v34, 4294901760
  %201 = vmatmul.mubr.f32.gmra.mxu0 %v200
  %v202 = vpop.f32.mrf.mxu0
  %v203 = vadd.f32 %v112, %v202
  %v204 = vpop.f32.mrf.mxu0
  %205 = vdwg.mxu0
  %206 = vmatprep.subr.mxu0 0.0
  %207 = vmatpush1.msra.mxu0 0.0
  %208 = vmatprep.subr.mxu0 0.0
  %209 = vmatpush1.msra.mxu0 0.0
  %210 = vmatprep.subr.mxu0 0.0
  %211 = vmatpush1.msra.mxu0 0.0
  %212 = vmatprep.subr.mxu0 0.0
  %213 = vmatpush1.msra.mxu0 0.0
  %214 = vmatprep.subr.mxu0 0.0
  %215 = vmatpush1.msra.mxu0 0.0
  %216 = vmatprep.subr.mxu0 0.0
  %217 = vmatpush1.msra.mxu0 0.0
  %218 = vmatprep.subr.mxu0 0.0
  %219 = vmatpush1.msra.mxu0 0.0
  %220 = vmatprep.subr.mxu0 0.0
  %221 = vmatpush1.msra.mxu0 0.0
  %222 = vmatprep.subr.mxu0 0.0
  %223 = vmatpush1.msra.mxu0 0.0
  %224 = vmatprep.subr.mxu0 0.0
  %225 = vmatpush1.msra.mxu0 0.0
  %226 = vmatprep.subr.mxu0 0.0
  %227 = vmatpush1.msra.mxu0 0.0
  %228 = vmatprep.subr.mxu0 0.0
  %229 = vmatpush1.msra.mxu0 0.0
  %230 = vmatprep.subr.mxu0 0.0
  %v231 = vand.u32 %v24, 4294901760
  %v232 = vsub.f32 %v24, %v231
  %233 = vmatpush1.msra.mxu0 %v232
  %234 = vmatprep.subr.mxu0 0.0
  %v235 = vand.u32 %v23, 4294901760
  %v236 = vsub.f32 %v23, %v235
  %237 = vmatpush1.msra.mxu0 %v236
  %238 = vmatprep.subr.mxu0 0.0
  %v239 = vand.u32 %v22, 4294901760
  %v240 = vsub.f32 %v22, %v239
  %241 = vmatpush1.msra.mxu0 %v240
  %242 = vmatprep.subr.mxu0 0.0
  %v243 = vand.u32 %v21, 4294901760
  %v244 = vsub.f32 %v21, %v243
  %245 = vmatpush1.msra.mxu0 %v244
  %246 = vmatprep.subr.mxu0 0.0
  %247 = vmatpush2.msra.mxu0 0.0
  %248 = vmatprep.subr.mxu0 0.0
  %249 = vmatpush2.msra.mxu0 0.0
  %250 = vmatprep.subr.mxu0 0.0
  %251 = vmatpush2.msra.mxu0 0.0
  %252 = vmatprep.subr.mxu0 0.0
  %253 = vmatpush2.msra.mxu0 0.0
  %254 = vmatprep.subr.mxu0 0.0
  %255 = vmatpush2.msra.mxu0 0.0
  %256 = vmatprep.subr.mxu0 0.0
  %257 = vmatpush2.msra.mxu0 0.0
  %258 = vmatprep.subr.mxu0 0.0
  %259 = vmatpush2.msra.mxu0 0.0
  %260 = vmatprep.subr.mxu0 0.0
  %261 = vmatpush2.msra.mxu0 0.0
  %262 = vmatprep.subr.mxu0 0.0
  %263 = vmatpush2.msra.mxu0 0.0
  %264 = vmatprep.subr.mxu0 0.0
  %265 = vmatpush2.msra.mxu0 0.0
  %266 = vmatprep.subr.mxu0 0.0
  %267 = vmatpush2.msra.mxu0 0.0
  %268 = vmatprep.subr.mxu0 0.0
  %269 = vmatpush2.msra.mxu0 0.0
  %270 = vmatprep.subr.mxu0 0.0
  %271 = vmatpush2.msra.mxu0 0.0
  %272 = vmatprep.subr.mxu0 0.0
  %273 = vmatpush2.msra.mxu0 0.0
  %274 = vmatprep.subr.mxu0 0.0
  %275 = vmatpush2.msra.mxu0 0.0
  %276 = vmatprep.subr.mxu0 0.0
  %277 = vmatpush2.msra.mxu0 0.0
  %278 = vmatprep.mubr.f32.mxu0 0.0
  %v279 = vand.u32 %v34, 4294901760
  %v280 = vsub.f32 %v34, %v279
  %281 = vmatmul.mubr.f32.gmra.mxu0 %v280
  %v282 = vpop.f32.mrf.mxu0
  %v283 = vadd.f32 %v203, %v282
  %v284 = vpop.f32.mrf.mxu0
  %285 = vdwg.mxu0
  %286 = vmatprep.subr.mxu0 0.0
  %287 = vmatpush1.msra.mxu0 0.0
  %288 = vmatprep.subr.mxu0 0.0
  %289 = vmatpush1.msra.mxu0 0.0
  %290 = vmatprep.subr.mxu0 0.0
  %291 = vmatpush1.msra.mxu0 0.0
  %292 = vmatprep.subr.mxu0 0.0
  %293 = vmatpush1.msra.mxu0 0.0
  %294 = vmatprep.subr.mxu0 0.0
  %295 = vmatpush1.msra.mxu0 0.0
  %296 = vmatprep.subr.mxu0 0.0
  %297 = vmatpush1.msra.mxu0 0.0
  %298 = vmatprep.subr.mxu0 0.0
  %299 = vmatpush1.msra.mxu0 0.0
  %300 = vmatprep.subr.mxu0 0.0
  %301 = vmatpush1.msra.mxu0 0.0
  %302 = vmatprep.subr.mxu0 0.0
  %303 = vmatpush1.msra.mxu0 0.0
  %304 = vmatprep.subr.mxu0 0.0
  %305 = vmatpush1.msra.mxu0 0.0
  %306 = vmatprep.subr.mxu0 0.0
  %307 = vmatpush1.msra.mxu0 0.0
  %308 = vmatprep.subr.mxu0 0.0
  %309 = vmatpush1.msra.mxu0 0.0
  %310 = vmatprep.subr.mxu0 0.0
  %v311 = vand.u32 %v24, 4294901760
  %312 = vmatpush1.msra.mxu0 %v311
  %313 = vmatprep.subr.mxu0 0.0
  %v314 = vand.u32 %v23, 4294901760
  %315 = vmatpush1.msra.mxu0 %v314
  %316 = vmatprep.subr.mxu0 0.0
  %v317 = vand.u32 %v22, 4294901760
  %318 = vmatpush1.msra.mxu0 %v317
  %319 = vmatprep.subr.mxu0 0.0
  %v320 = vand.u32 %v21, 4294901760
  %321 = vmatpush1.msra.mxu0 %v320
  %322 = vmatprep.subr.mxu0 0.0
  %323 = vmatpush2.msra.mxu0 0.0
  %324 = vmatprep.subr.mxu0 0.0
  %325 = vmatpush2.msra.mxu0 0.0
  %326 = vmatprep.subr.mxu0 0.0
  %327 = vmatpush2.msra.mxu0 0.0
  %328 = vmatprep.subr.mxu0 0.0
  %329 = vmatpush2.msra.mxu0 0.0
  %330 = vmatprep.subr.mxu0 0.0
  %331 = vmatpush2.msra.mxu0 0.0
  %332 = vmatprep.subr.mxu0 0.0
  %333 = vmatpush2.msra.mxu0 0.0
  %334 = vmatprep.subr.mxu0 0.0
  %335 = vmatpush2.msra.mxu0 0.0
  %336 = vmatprep.subr.mxu0 0.0
  %337 = vmatpush2.msra.mxu0 0.0
  %338 = vmatprep.subr.mxu0 0.0
  %339 = vmatpush2.msra.mxu0 0.0
  %340 = vmatprep.subr.mxu0 0.0
  %341 = vmatpush2.msra.mxu0 0.0
  %342 = vmatprep.subr.mxu0 0.0
  %343 = vmatpush2.msra.mxu0 0.0
  %344 = vmatprep.subr.mxu0 0.0
  %345 = vmatpush2.msra.mxu0 0.0
  %346 = vmatprep.subr.mxu0 0.0
  %347 = vmatpush2.msra.mxu0 0.0
  %348 = vmatprep.subr.mxu0 0.0
  %349 = vmatpush2.msra.mxu0 0.0
  %350 = vmatprep.subr.mxu0 0.0
  %351 = vmatpush2.msra.mxu0 0.0
  %352 = vmatprep.subr.mxu0 0.0
  %353 = vmatpush2.msra.mxu0 0.0
  %354 = vmatprep.mubr.f32.mxu0 0.0
  %v355 = vand.u32 %v34, 4294901760
  %v356 = vsub.f32 %v34, %v355
  %v357 = vand.u32 %v356, 4294901760
  %358 = vmatmul.mubr.f32.gmra.mxu0 %v357
  %v359 = vpop.f32.mrf.mxu0
  %v360 = vadd.f32 %v283, %v359
  %v361 = vpop.f32.mrf.mxu0
  %362 = vdwg.mxu0
  %363 = vmatprep.subr.mxu0 0.0
  %364 = vmatpush1.msra.mxu0 0.0
  %365 = vmatprep.subr.mxu0 0.0
  %366 = vmatpush1.msra.mxu0 0.0
  %367 = vmatprep.subr.mxu0 0.0
  %368 = vmatpush1.msra.mxu0 0.0
  %369 = vmatprep.subr.mxu0 0.0
  %370 = vmatpush1.msra.mxu0 0.0
  %371 = vmatprep.subr.mxu0 0.0
  %372 = vmatpush1.msra.mxu0 0.0
  %373 = vmatprep.subr.mxu0 0.0
  %374 = vmatpush1.msra.mxu0 0.0
  %375 = vmatprep.subr.mxu0 0.0
  %376 = vmatpush1.msra.mxu0 0.0
  %377 = vmatprep.subr.mxu0 0.0
  %378 = vmatpush1.msra.mxu0 0.0
  %379 = vmatprep.subr.mxu0 0.0
  %380 = vmatpush1.msra.mxu0 0.0
  %381 = vmatprep.subr.mxu0 0.0
  %382 = vmatpush1.msra.mxu0 0.0
  %383 = vmatprep.subr.mxu0 0.0
  %384 = vmatpush1.msra.mxu0 0.0
  %385 = vmatprep.subr.mxu0 0.0
  %386 = vmatpush1.msra.mxu0 0.0
  %387 = vmatprep.subr.mxu0 0.0
  %v388 = vand.u32 %v24, 4294901760
  %v389 = vsub.f32 %v24, %v388
  %v390 = vand.u32 %v389, 4294901760
  %391 = vmatpush1.msra.mxu0 %v390
  %392 = vmatprep.subr.mxu0 0.0
  %v393 = vand.u32 %v23, 4294901760
  %v394 = vsub.f32 %v23, %v393
  %v395 = vand.u32 %v394, 4294901760
  %396 = vmatpush1.msra.mxu0 %v395
  %397 = vmatprep.subr.mxu0 0.0
  %v398 = vand.u32 %v22, 4294901760
  %v399 = vsub.f32 %v22, %v398
  %v400 = vand.u32 %v399, 4294901760
  %401 = vmatpush1.msra.mxu0 %v400
  %402 = vmatprep.subr.mxu0 0.0
  %v403 = vand.u32 %v21, 4294901760
  %v404 = vsub.f32 %v21, %v403
  %v405 = vand.u32 %v404, 4294901760
  %406 = vmatpush1.msra.mxu0 %v405
  %407 = vmatprep.subr.mxu0 0.0
  %408 = vmatpush2.msra.mxu0 0.0
  %409 = vmatprep.subr.mxu0 0.0
  %410 = vmatpush2.msra.mxu0 0.0
  %411 = vmatprep.subr.mxu0 0.0
  %412 = vmatpush2.msra.mxu0 0.0
  %413 = vmatprep.subr.mxu0 0.0
  %414 = vmatpush2.msra.mxu0 0.0
  %415 = vmatprep.subr.mxu0 0.0
  %416 = vmatpush2.msra.mxu0 0.0
  %417 = vmatprep.subr.mxu0 0.0
  %418 = vmatpush2.msra.mxu0 0.0
  %419 = vmatprep.subr.mxu0 0.0
  %420 = vmatpush2.msra.mxu0 0.0
  %421 = vmatprep.subr.mxu0 0.0
  %422 = vmatpush2.msra.mxu0 0.0
  %423 = vmatprep.subr.mxu0 0.0
  %424 = vmatpush2.msra.mxu0 0.0
  %425 = vmatprep.subr.mxu0 0.0
  %426 = vmatpush2.msra.mxu0 0.0
  %427 = vmatprep.subr.mxu0 0.0
  %428 = vmatpush2.msra.mxu0 0.0
  %429 = vmatprep.subr.mxu0 0.0
  %430 = vmatpush2.msra.mxu0 0.0
  %431 = vmatprep.subr.mxu0 0.0
  %432 = vmatpush2.msra.mxu0 0.0
  %433 = vmatprep.subr.mxu0 0.0
  %434 = vmatpush2.msra.mxu0 0.0
  %435 = vmatprep.subr.mxu0 0.0
  %436 = vmatpush2.msra.mxu0 0.0
  %437 = vmatprep.subr.mxu0 0.0
  %438 = vmatpush2.msra.mxu0 0.0
  %439 = vmatprep.mubr.f32.mxu0 0.0
  %v440 = vand.u32 %v34, 4294901760
  %441 = vmatmul.mubr.f32.gmra.mxu0 %v440
  %v442 = vpop.f32.mrf.mxu0
  %v443 = vadd.f32 %v360, %v442
  %v444 = vpop.f32.mrf.mxu0
  %445 = vdwg.mxu0
  %446 = vmatprep.subr.mxu0 0.0
  %447 = vmatpush1.msra.mxu0 0.0
  %448 = vmatprep.subr.mxu0 0.0
  %449 = vmatpush1.msra.mxu0 0.0
  %450 = vmatprep.subr.mxu0 0.0
  %451 = vmatpush1.msra.mxu0 0.0
  %452 = vmatprep.subr.mxu0 0.0
  %453 = vmatpush1.msra.mxu0 0.0
  %454 = vmatprep.subr.mxu0 0.0
  %455 = vmatpush1.msra.mxu0 0.0
  %456 = vmatprep.subr.mxu0 0.0
  %457 = vmatpush1.msra.mxu0 0.0
  %458 = vmatprep.subr.mxu0 0.0
  %459 = vmatpush1.msra.mxu0 0.0
  %460 = vmatprep.subr.mxu0 0.0
  %461 = vmatpush1.msra.mxu0 0.0
  %462 = vmatprep.subr.mxu0 0.0
  %463 = vmatpush1.msra.mxu0 0.0
  %464 = vmatprep.subr.mxu0 0.0
  %465 = vmatpush1.msra.mxu0 0.0
  %466 = vmatprep.subr.mxu0 0.0
  %467 = vmatpush1.msra.mxu0 0.0
  %468 = vmatprep.subr.mxu0 0.0
  %469 = vmatpush1.msra.mxu0 0.0
  %470 = vmatprep.subr.mxu0 0.0
  %v471 = vand.u32 %v24, 4294901760
  %472 = vmatpush1.msra.mxu0 %v471
  %473 = vmatprep.subr.mxu0 0.0
  %v474 = vand.u32 %v23, 4294901760
  %475 = vmatpush1.msra.mxu0 %v474
  %476 = vmatprep.subr.mxu0 0.0
  %v477 = vand.u32 %v22, 4294901760
  %478 = vmatpush1.msra.mxu0 %v477
  %479 = vmatprep.subr.mxu0 0.0
  %v480 = vand.u32 %v21, 4294901760
  %481 = vmatpush1.msra.mxu0 %v480
  %482 = vmatprep.subr.mxu0 0.0
  %483 = vmatpush2.msra.mxu0 0.0
  %484 = vmatprep.subr.mxu0 0.0
  %485 = vmatpush2.msra.mxu0 0.0
  %486 = vmatprep.subr.mxu0 0.0
  %487 = vmatpush2.msra.mxu0 0.0
  %488 = vmatprep.subr.mxu0 0.0
  %489 = vmatpush2.msra.mxu0 0.0
  %490 = vmatprep.subr.mxu0 0.0
  %491 = vmatpush2.msra.mxu0 0.0
  %492 = vmatprep.subr.mxu0 0.0
  %493 = vmatpush2.msra.mxu0 0.0
  %494 = vmatprep.subr.mxu0 0.0
  %495 = vmatpush2.msra.mxu0 0.0
  %496 = vmatprep.subr.mxu0 0.0
  %497 = vmatpush2.msra.mxu0 0.0
  %498 = vmatprep.subr.mxu0 0.0
  %499 = vmatpush2.msra.mxu0 0.0
  %500 = vmatprep.subr.mxu0 0.0
  %501 = vmatpush2.msra.mxu0 0.0
  %502 = vmatprep.subr.mxu0 0.0
  %503 = vmatpush2.msra.mxu0 0.0
  %504 = vmatprep.subr.mxu0 0.0
  %505 = vmatpush2.msra.mxu0 0.0
  %506 = vmatprep.subr.mxu0 0.0
  %507 = vmatpush2.msra.mxu0 0.0
  %508 = vmatprep.subr.mxu0 0.0
  %509 = vmatpush2.msra.mxu0 0.0
  %510 = vmatprep.subr.mxu0 0.0
  %511 = vmatpush2.msra.mxu0 0.0
  %512 = vmatprep.subr.mxu0 0.0
  %513 = vmatpush2.msra.mxu0 0.0
  %514 = vmatprep.mubr.f32.mxu0 0.0
  %v515 = vand.u32 %v34, 4294901760
  %516 = vmatmul.mubr.f32.gmra.mxu0 %v515
  %v517 = vpop.f32.mrf.mxu0
  %v518 = vadd.f32 %v443, %v517
  %v519 = vpop.f32.mrf.mxu0
  %520 = vdwg.mxu0
  %v521 = vtanh.pop %v518
  %v522 = vld [vmem:[%s3] sm:$0xff]
  %v523 = vld [vmem:[%s3 + $0x8] sm:$0xff]
  %v524 = vld [vmem:[%s3 + $0x10] sm:$0xff]
  %v525 = vld [vmem:[%s3 + $0x18] sm:$0xff]
  %v526 = vld [vmem:[%s3 + $0x20] sm:$0xff]
  %v527 = vld [vmem:[%s3 + $0x28] sm:$0xff]
  %v528 = vld [vmem:[%s3 + $0x30] sm:$0xff]
  %v529 = vld [vmem:[%s3 + $0x38] sm:$0xff]
  %v530 = vld [vmem:[%s3 + $0x40] sm:$0xff]
  %v531 = vld [vmem:[%s3 + $0x48] sm:$0xff]
  %v532 = vld [vmem:[%s3 + $0x50] sm:$0xff]
  %v533 = vld [vmem:[%s3 + $0x58] sm:$0xff]
  %v534 = vld [vmem:[%s3 + $0x60] sm:$0xff]
  %v535 = vld [vmem:[%s3 + $0x68] sm:$0xff]
  %v536 = vld [vmem:[%s3 + $0x70] sm:$0xff]
  %v537 = vld [vmem:[%s3 + $0x78] sm:$0xff]
  %v538 = vld [vmem:[%s4] sm:$0x1]
  %v540 = vlaneseq
  %v541 = vshrl.u32 %v540, 7
  %v542 = vsub.s32 0, %v541
  %v543 = vrot.slane %v538, %v542
  %545 = vmatprep.subr.mxu0 0.0
  %v546 = vand.u32 %v537, 4294901760
  %547 = vmatpush1.msra.mxu0 %v546
  %548 = vmatprep.subr.mxu0 0.0
  %v549 = vand.u32 %v536, 4294901760
  %550 = vmatpush1.msra.mxu0 %v549
  %551 = vmatprep.subr.mxu0 0.0
  %v552 = vand.u32 %v535, 4294901760
  %553 = vmatpush1.msra.mxu0 %v552
  %554 = vmatprep.subr.mxu0 0.0
  %v555 = vand.u32 %v534, 4294901760
  %556 = vmatpush1.msra.mxu0 %v555
  %557 = vmatprep.subr.mxu0 0.0
  %v558 = vand.u32 %v533, 4294901760
  %559 = vmatpush1.msra.mxu0 %v558
  %560 = vmatprep.subr.mxu0 0.0
  %v561 = vand.u32 %v532, 4294901760
  %562 = vmatpush1.msra.mxu0 %v561
  %563 = vmatprep.subr.mxu0 0.0
  %v564 = vand.u32 %v531, 4294901760
  %565 = vmatpush1.msra.mxu0 %v564
  %566 = vmatprep.subr.mxu0 0.0
  %v567 = vand.u32 %v530, 4294901760
  %568 = vmatpush1.msra.mxu0 %v567
  %569 = vmatprep.subr.mxu0 0.0
  %v570 = vand.u32 %v529, 4294901760
  %571 = vmatpush1.msra.mxu0 %v570
  %572 = vmatprep.subr.mxu0 0.0
  %v573 = vand.u32 %v528, 4294901760
  %574 = vmatpush1.msra.mxu0 %v573
  %575 = vmatprep.subr.mxu0 0.0
  %v576 = vand.u32 %v527, 4294901760
  %577 = vmatpush1.msra.mxu0 %v576
  %578 = vmatprep.subr.mxu0 0.0
  %v579 = vand.u32 %v526, 4294901760
  %580 = vmatpush1.msra.mxu0 %v579
  %581 = vmatprep.subr.mxu0 0.0
  %v582 = vand.u32 %v525, 4294901760
  %583 = vmatpush1.msra.mxu0 %v582
  %584 = vmatprep.subr.mxu0 0.0
  %v585 = vand.u32 %v524, 4294901760
  %586 = vmatpush1.msra.mxu0 %v585
  %587 = vmatprep.subr.mxu0 0.0
  %v588 = vand.u32 %v523, 4294901760
  %589 = vmatpush1.msra.mxu0 %v588
  %590 = vmatprep.subr.mxu0 0.0
  %v591 = vand.u32 %v522, 4294901760
  %592 = vmatpush1.msra.mxu0 %v591
  %593 = vmatprep.subr.mxu0 0.0
  %594 = vmatpush2.msra.mxu0 0.0
  %595 = vmatprep.subr.mxu0 0.0
  %596 = vmatpush2.msra.mxu0 0.0
  %597 = vmatprep.subr.mxu0 0.0
  %598 = vmatpush2.msra.mxu0 0.0
  %599 = vmatprep.subr.mxu0 0.0
  %600 = vmatpush2.msra.mxu0 0.0
  %601 = vmatprep.subr.mxu0 0.0
  %602 = vmatpush2.msra.mxu0 0.0
  %603 = vmatprep.subr.mxu0 0.0
  %604 = vmatpush2.msra.mxu0 0.0
  %605 = vmatprep.subr.mxu0 0.0
  %606 = vmatpush2.msra.mxu0 0.0
  %607 = vmatprep.subr.mxu0 0.0
  %608 = vmatpush2.msra.mxu0 0.0
  %609 = vmatprep.subr.mxu0 0.0
  %610 = vmatpush2.msra.mxu0 0.0
  %611 = vmatprep.subr.mxu0 0.0
  %612 = vmatpush2.msra.mxu0 0.0
  %613 = vmatprep.subr.mxu0 0.0
  %614 = vmatpush2.msra.mxu0 0.0
  %615 = vmatprep.subr.mxu0 0.0
  %616 = vmatpush2.msra.mxu0 0.0
  %617 = vmatprep.subr.mxu0 0.0
  %618 = vmatpush2.msra.mxu0 0.0
  %619 = vmatprep.subr.mxu0 0.0
  %620 = vmatpush2.msra.mxu0 0.0
  %621 = vmatprep.subr.mxu0 0.0
  %622 = vmatpush2.msra.mxu0 0.0
  %623 = vmatprep.subr.mxu0 0.0
  %624 = vmatpush2.msra.mxu0 0.0
  %625 = vmatprep.mubr.f32.mxu0 0.0
  %v626 = vand.u32 %v521, 4294901760
  %v627 = vsub.f32 %v521, %v626
  %v628 = vand.u32 %v627, 4294901760
  %v629 = vsub.f32 %v627, %v628
  %v630 = vand.u32 %v629, 4294901760
  %631 = vmatmul.mubr.f32.gmra.mxu0 %v630
  %v632 = vpop.f32.mrf.mxu0
  %v633 = vadd.f32 %v543, %v632
  %v634 = vpop.f32.mrf.mxu0
  %635 = vdwg.mxu0
  %636 = vmatprep.subr.mxu0 0.0
  %v637 = vand.u32 %v537, 4294901760
  %v638 = vsub.f32 %v537, %v637
  %v639 = vand.u32 %v638, 4294901760
  %v640 = vsub.f32 %v638, %v639
  %v641 = vand.u32 %v640, 4294901760
  %642 = vmatpush1.msra.mxu0 %v641
  %643 = vmatprep.subr.mxu0 0.0
  %v644 = vand.u32 %v536, 4294901760
  %v645 = vsub.f32 %v536, %v644
  %v646 = vand.u32 %v645, 4294901760
  %v647 = vsub.f32 %v645, %v646
  %v648 = vand.u32 %v647, 4294901760
  %649 = vmatpush1.msra.mxu0 %v648
  %650 = vmatprep.subr.mxu0 0.0
  %v651 = vand.u32 %v535, 4294901760
  %v652 = vsub.f32 %v535, %v651
  %v653 = vand.u32 %v652, 4294901760
  %v654 = vsub.f32 %v652, %v653
  %v655 = vand.u32 %v654, 4294901760
  %656 = vmatpush1.msra.mxu0 %v655
  %657 = vmatprep.subr.mxu0 0.0
  %v658 = vand.u32 %v534, 4294901760
  %v659 = vsub.f32 %v534, %v658
  %v660 = vand.u32 %v659, 4294901760
  %v661 = vsub.f32 %v659, %v660
  %v662 = vand.u32 %v661, 4294901760
  %663 = vmatpush1.msra.mxu0 %v662
  %664 = vmatprep.subr.mxu0 0.0
  %v665 = vand.u32 %v533, 4294901760
  %v666 = vsub.f32 %v533, %v665
  %v667 = vand.u32 %v666, 4294901760
  %v668 = vsub.f32 %v666, %v667
  %v669 = vand.u32 %v668, 4294901760
  %670 = vmatpush1.msra.mxu0 %v669
  %671 = vmatprep.subr.mxu0 0.0
  %v672 = vand.u32 %v532, 4294901760
  %v673 = vsub.f32 %v532, %v672
  %v674 = vand.u32 %v673, 4294901760
  %v675 = vsub.f32 %v673, %v674
  %v676 = vand.u32 %v675, 4294901760
  %677 = vmatpush1.msra.mxu0 %v676
  %678 = vmatprep.subr.mxu0 0.0
  %v679 = vand.u32 %v531, 4294901760
  %v680 = vsub.f32 %v531, %v679
  %v681 = vand.u32 %v680, 4294901760
  %v682 = vsub.f32 %v680, %v681
  %v683 = vand.u32 %v682, 4294901760
  %684 = vmatpush1.msra.mxu0 %v683
  %685 = vmatprep.subr.mxu0 0.0
  %v686 = vand.u32 %v530, 4294901760
  %v687 = vsub.f32 %v530, %v686
  %v688 = vand.u32 %v687, 4294901760
  %v689 = vsub.f32 %v687, %v688
  %v690 = vand.u32 %v689, 4294901760
  %691 = vmatpush1.msra.mxu0 %v690
  %692 = vmatprep.subr.mxu0 0.0
  %v693 = vand.u32 %v529, 4294901760
  %v694 = vsub.f32 %v529, %v693
  %v695 = vand.u32 %v694, 4294901760
  %v696 = vsub.f32 %v694, %v695
  %v697 = vand.u32 %v696, 4294901760
  %698 = vmatpush1.msra.mxu0 %v697
  %699 = vmatprep.subr.mxu0 0.0
  %v700 = vand.u32 %v528, 4294901760
  %v701 = vsub.f32 %v528, %v700
  %v702 = vand.u32 %v701, 4294901760
  %v703 = vsub.f32 %v701, %v702
  %v704 = vand.u32 %v703, 4294901760
  %705 = vmatpush1.msra.mxu0 %v704
  %706 = vmatprep.subr.mxu0 0.0
  %v707 = vand.u32 %v527, 4294901760
  %v708 = vsub.f32 %v527, %v707
  %v709 = vand.u32 %v708, 4294901760
  %v710 = vsub.f32 %v708, %v709
  %v711 = vand.u32 %v710, 4294901760
  %712 = vmatpush1.msra.mxu0 %v711
  %713 = vmatprep.subr.mxu0 0.0
  %v714 = vand.u32 %v526, 4294901760
  %v715 = vsub.f32 %v526, %v714
  %v716 = vand.u32 %v715, 4294901760
  %v717 = vsub.f32 %v715, %v716
  %v718 = vand.u32 %v717, 4294901760
  %719 = vmatpush1.msra.mxu0 %v718
  %720 = vmatprep.subr.mxu0 0.0
  %v721 = vand.u32 %v525, 4294901760
  %v722 = vsub.f32 %v525, %v721
  %v723 = vand.u32 %v722, 4294901760
  %v724 = vsub.f32 %v722, %v723
  %v725 = vand.u32 %v724, 4294901760
  %726 = vmatpush1.msra.mxu0 %v725
  %727 = vmatprep.subr.mxu0 0.0
  %v728 = vand.u32 %v524, 4294901760
  %v729 = vsub.f32 %v524, %v728
  %v730 = vand.u32 %v729, 4294901760
  %v731 = vsub.f32 %v729, %v730
  %v732 = vand.u32 %v731, 4294901760
  %733 = vmatpush1.msra.mxu0 %v732
  %734 = vmatprep.subr.mxu0 0.0
  %v735 = vand.u32 %v523, 4294901760
  %v736 = vsub.f32 %v523, %v735
  %v737 = vand.u32 %v736, 4294901760
  %v738 = vsub.f32 %v736, %v737
  %v739 = vand.u32 %v738, 4294901760
  %740 = vmatpush1.msra.mxu0 %v739
  %741 = vmatprep.subr.mxu0 0.0
  %v742 = vand.u32 %v522, 4294901760
  %v743 = vsub.f32 %v522, %v742
  %v744 = vand.u32 %v743, 4294901760
  %v745 = vsub.f32 %v743, %v744
  %v746 = vand.u32 %v745, 4294901760
  %747 = vmatpush1.msra.mxu0 %v746
  %748 = vmatprep.subr.mxu0 0.0
  %749 = vmatpush2.msra.mxu0 0.0
  %750 = vmatprep.subr.mxu0 0.0
  %751 = vmatpush2.msra.mxu0 0.0
  %752 = vmatprep.subr.mxu0 0.0
  %753 = vmatpush2.msra.mxu0 0.0
  %754 = vmatprep.subr.mxu0 0.0
  %755 = vmatpush2.msra.mxu0 0.0
  %756 = vmatprep.subr.mxu0 0.0
  %757 = vmatpush2.msra.mxu0 0.0
  %758 = vmatprep.subr.mxu0 0.0
  %759 = vmatpush2.msra.mxu0 0.0
  %760 = vmatprep.subr.mxu0 0.0
  %761 = vmatpush2.msra.mxu0 0.0
  %762 = vmatprep.subr.mxu0 0.0
  %763 = vmatpush2.msra.mxu0 0.0
  %764 = vmatprep.subr.mxu0 0.0
  %765 = vmatpush2.msra.mxu0 0.0
  %766 = vmatprep.subr.mxu0 0.0
  %767 = vmatpush2.msra.mxu0 0.0
  %768 = vmatprep.subr.mxu0 0.0
  %769 = vmatpush2.msra.mxu0 0.0
  %770 = vmatprep.subr.mxu0 0.0
  %771 = vmatpush2.msra.mxu0 0.0
  %772 = vmatprep.subr.mxu0 0.0
  %773 = vmatpush2.msra.mxu0 0.0
  %774 = vmatprep.subr.mxu0 0.0
  %775 = vmatpush2.msra.mxu0 0.0
  %776 = vmatprep.subr.mxu0 0.0
  %777 = vmatpush2.msra.mxu0 0.0
  %778 = vmatprep.subr.mxu0 0.0
  %779 = vmatpush2.msra.mxu0 0.0
  %780 = vmatprep.mubr.f32.mxu0 0.0
  %v781 = vand.u32 %v521, 4294901760
  %782 = vmatmul.mubr.f32.gmra.mxu0 %v781
  %v783 = vpop.f32.mrf.mxu0
  %v784 = vadd.f32 %v633, %v783
  %v785 = vpop.f32.mrf.mxu0
  %786 = vdwg.mxu0
  %787 = vmatprep.subr.mxu0 0.0
  %v788 = vand.u32 %v537, 4294901760
  %v789 = vsub.f32 %v537, %v788
  %790 = vmatpush1.msra.mxu0 %v789
  %791 = vmatprep.subr.mxu0 0.0
  %v792 = vand.u32 %v536, 4294901760
  %v793 = vsub.f32 %v536, %v792
  %794 = vmatpush1.msra.mxu0 %v793
  %795 = vmatprep.subr.mxu0 0.0
  %v796 = vand.u32 %v535, 4294901760
  %v797 = vsub.f32 %v535, %v796
  %798 = vmatpush1.msra.mxu0 %v797
  %799 = vmatprep.subr.mxu0 0.0
  %v800 = vand.u32 %v534, 4294901760
  %v801 = vsub.f32 %v534, %v800
  %802 = vmatpush1.msra.mxu0 %v801
  %803 = vmatprep.subr.mxu0 0.0
  %v804 = vand.u32 %v533, 4294901760
  %v805 = vsub.f32 %v533, %v804
  %806 = vmatpush1.msra.mxu0 %v805
  %807 = vmatprep.subr.mxu0 0.0
  %v808 = vand.u32 %v532, 4294901760
  %v809 = vsub.f32 %v532, %v808
  %810 = vmatpush1.msra.mxu0 %v809
  %811 = vmatprep.subr.mxu0 0.0
  %v812 = vand.u32 %v531, 4294901760
  %v813 = vsub.f32 %v531, %v812
  %814 = vmatpush1.msra.mxu0 %v813
  %815 = vmatprep.subr.mxu0 0.0
  %v816 = vand.u32 %v530, 4294901760
  %v817 = vsub.f32 %v530, %v816
  %818 = vmatpush1.msra.mxu0 %v817
  %819 = vmatprep.subr.mxu0 0.0
  %v820 = vand.u32 %v529, 4294901760
  %v821 = vsub.f32 %v529, %v820
  %822 = vmatpush1.msra.mxu0 %v821
  %823 = vmatprep.subr.mxu0 0.0
  %v824 = vand.u32 %v528, 4294901760
  %v825 = vsub.f32 %v528, %v824
  %826 = vmatpush1.msra.mxu0 %v825
  %827 = vmatprep.subr.mxu0 0.0
  %v828 = vand.u32 %v527, 4294901760
  %v829 = vsub.f32 %v527, %v828
  %830 = vmatpush1.msra.mxu0 %v829
  %831 = vmatprep.subr.mxu0 0.0
  %v832 = vand.u32 %v526, 4294901760
  %v833 = vsub.f32 %v526, %v832
  %834 = vmatpush1.msra.mxu0 %v833
  %835 = vmatprep.subr.mxu0 0.0
  %v836 = vand.u32 %v525, 4294901760
  %v837 = vsub.f32 %v525, %v836
  %838 = vmatpush1.msra.mxu0 %v837
  %839 = vmatprep.subr.mxu0 0.0
  %v840 = vand.u32 %v524, 4294901760
  %v841 = vsub.f32 %v524, %v840
  %842 = vmatpush1.msra.mxu0 %v841
  %843 = vmatprep.subr.mxu0 0.0
  %v844 = vand.u32 %v523, 4294901760
  %v845 = vsub.f32 %v523, %v844
  %846 = vmatpush1.msra.mxu0 %v845
  %847 = vmatprep.subr.mxu0 0.0
  %v848 = vand.u32 %v522, 4294901760
  %v849 = vsub.f32 %v522, %v848
  %850 = vmatpush1.msra.mxu0 %v849
  %851 = vmatprep.subr.mxu0 0.0
  %852 = vmatpush2.msra.mxu0 0.0
  %853 = vmatprep.subr.mxu0 0.0
  %854 = vmatpush2.msra.mxu0 0.0
  %855 = vmatprep.subr.mxu0 0.0
  %856 = vmatpush2.msra.mxu0 0.0
  %857 = vmatprep.subr.mxu0 0.0
  %858 = vmatpush2.msra.mxu0 0.0
  %859 = vmatprep.subr.mxu0 0.0
  %860 = vmatpush2.msra.mxu0 0.0
  %861 = vmatprep.subr.mxu0 0.0
  %862 = vmatpush2.msra.mxu0 0.0
  %863 = vmatprep.subr.mxu0 0.0
  %864 = vmatpush2.msra.mxu0 0.0
  %865 = vmatprep.subr.mxu0 0.0
  %866 = vmatpush2.msra.mxu0 0.0
  %867 = vmatprep.subr.mxu0 0.0
  %868 = vmatpush2.msra.mxu0 0.0
  %869 = vmatprep.subr.mxu0 0.0
  %870 = vmatpush2.msra.mxu0 0.0
  %871 = vmatprep.subr.mxu0 0.0
  %872 = vmatpush2.msra.mxu0 0.0
  %873 = vmatprep.subr.mxu0 0.0
  %874 = vmatpush2.msra.mxu0 0.0
  %875 = vmatprep.subr.mxu0 0.0
  %876 = vmatpush2.msra.mxu0 0.0
  %877 = vmatprep.subr.mxu0 0.0
  %878 = vmatpush2.msra.mxu0 0.0
  %879 = vmatprep.subr.mxu0 0.0
  %880 = vmatpush2.msra.mxu0 0.0
  %881 = vmatprep.subr.mxu0 0.0
  %882 = vmatpush2.msra.mxu0 0.0
  %883 = vmatprep.mubr.f32.mxu0 0.0
  %v884 = vand.u32 %v521, 4294901760
  %v885 = vsub.f32 %v521, %v884
  %886 = vmatmul.mubr.f32.gmra.mxu0 %v885
  %v887 = vpop.f32.mrf.mxu0
  %v888 = vadd.f32 %v784, %v887
  %v889 = vpop.f32.mrf.mxu0
  %890 = vdwg.mxu0
  %891 = vmatprep.subr.mxu0 0.0
  %v892 = vand.u32 %v537, 4294901760
  %893 = vmatpush1.msra.mxu0 %v892
  %894 = vmatprep.subr.mxu0 0.0
  %v895 = vand.u32 %v536, 4294901760
  %896 = vmatpush1.msra.mxu0 %v895
  %897 = vmatprep.subr.mxu0 0.0
  %v898 = vand.u32 %v535, 4294901760
  %899 = vmatpush1.msra.mxu0 %v898
  %900 = vmatprep.subr.mxu0 0.0
  %v901 = vand.u32 %v534, 4294901760
  %902 = vmatpush1.msra.mxu0 %v901
  %903 = vmatprep.subr.mxu0 0.0
  %v904 = vand.u32 %v533, 4294901760
  %905 = vmatpush1.msra.mxu0 %v904
  %906 = vmatprep.subr.mxu0 0.0
  %v907 = vand.u32 %v532, 4294901760
  %908 = vmatpush1.msra.mxu0 %v907
  %909 = vmatprep.subr.mxu0 0.0
  %v910 = vand.u32 %v531, 4294901760
  %911 = vmatpush1.msra.mxu0 %v910
  %912 = vmatprep.subr.mxu0 0.0
  %v913 = vand.u32 %v530, 4294901760
  %914 = vmatpush1.msra.mxu0 %v913
  %915 = vmatprep.subr.mxu0 0.0
  %v916 = vand.u32 %v529, 4294901760
  %917 = vmatpush1.msra.mxu0 %v916
  %918 = vmatprep.subr.mxu0 0.0
  %v919 = vand.u32 %v528, 4294901760
  %920 = vmatpush1.msra.mxu0 %v919
  %921 = vmatprep.subr.mxu0 0.0
  %v922 = vand.u32 %v527, 4294901760
  %923 = vmatpush1.msra.mxu0 %v922
  %924 = vmatprep.subr.mxu0 0.0
  %v925 = vand.u32 %v526, 4294901760
  %926 = vmatpush1.msra.mxu0 %v925
  %927 = vmatprep.subr.mxu0 0.0
  %v928 = vand.u32 %v525, 4294901760
  %929 = vmatpush1.msra.mxu0 %v928
  %930 = vmatprep.subr.mxu0 0.0
  %v931 = vand.u32 %v524, 4294901760
  %932 = vmatpush1.msra.mxu0 %v931
  %933 = vmatprep.subr.mxu0 0.0
  %v934 = vand.u32 %v523, 4294901760
  %935 = vmatpush1.msra.mxu0 %v934
  %936 = vmatprep.subr.mxu0 0.0
  %v937 = vand.u32 %v522, 4294901760
  %938 = vmatpush1.msra.mxu0 %v937
  %939 = vmatprep.subr.mxu0 0.0
  %940 = vmatpush2.msra.mxu0 0.0
  %941 = vmatprep.subr.mxu0 0.0
  %942 = vmatpush2.msra.mxu0 0.0
  %943 = vmatprep.subr.mxu0 0.0
  %944 = vmatpush2.msra.mxu0 0.0
  %945 = vmatprep.subr.mxu0 0.0
  %946 = vmatpush2.msra.mxu0 0.0
  %947 = vmatprep.subr.mxu0 0.0
  %948 = vmatpush2.msra.mxu0 0.0
  %949 = vmatprep.subr.mxu0 0.0
  %950 = vmatpush2.msra.mxu0 0.0
  %951 = vmatprep.subr.mxu0 0.0
  %952 = vmatpush2.msra.mxu0 0.0
  %953 = vmatprep.subr.mxu0 0.0
  %954 = vmatpush2.msra.mxu0 0.0
  %955 = vmatprep.subr.mxu0 0.0
  %956 = vmatpush2.msra.mxu0 0.0
  %957 = vmatprep.subr.mxu0 0.0
  %958 = vmatpush2.msra.mxu0 0.0
  %959 = vmatprep.subr.mxu0 0.0
  %960 = vmatpush2.msra.mxu0 0.0
  %961 = vmatprep.subr.mxu0 0.0
  %962 = vmatpush2.msra.mxu0 0.0
  %963 = vmatprep.subr.mxu0 0.0
  %964 = vmatpush2.msra.mxu0 0.0
  %965 = vmatprep.subr.mxu0 0.0
  %966 = vmatpush2.msra.mxu0 0.0
  %967 = vmatprep.subr.mxu0 0.0
  %968 = vmatpush2.msra.mxu0 0.0
  %969 = vmatprep.subr.mxu0 0.0
  %970 = vmatpush2.msra.mxu0 0.0
  %971 = vmatprep.mubr.f32.mxu0 0.0
  %v972 = vand.u32 %v521, 4294901760
  %v973 = vsub.f32 %v521, %v972
  %v974 = vand.u32 %v973, 4294901760
  %975 = vmatmul.mubr.f32.gmra.mxu0 %v974
  %v976 = vpop.f32.mrf.mxu0
  %v977 = vadd.f32 %v888, %v976
  %v978 = vpop.f32.mrf.mxu0
  %979 = vdwg.mxu0
  %980 = vmatprep.subr.mxu0 0.0
  %v981 = vand.u32 %v537, 4294901760
  %v982 = vsub.f32 %v537, %v981
  %v983 = vand.u32 %v982, 4294901760
  %984 = vmatpush1.msra.mxu0 %v983
  %985 = vmatprep.subr.mxu0 0.0
  %v986 = vand.u32 %v536, 4294901760
  %v987 = vsub.f32 %v536, %v986
  %v988 = vand.u32 %v987, 4294901760
  %989 = vmatpush1.msra.mxu0 %v988
  %990 = vmatprep.subr.mxu0 0.0
  %v991 = vand.u32 %v535, 4294901760
  %v992 = vsub.f32 %v535, %v991
  %v993 = vand.u32 %v992, 4294901760
  %994 = vmatpush1.msra.mxu0 %v993
  %995 = vmatprep.subr.mxu0 0.0
  %v996 = vand.u32 %v534, 4294901760
  %v997 = vsub.f32 %v534, %v996
  %v998 = vand.u32 %v997, 4294901760
  %999 = vmatpush1.msra.mxu0 %v998
  %1000 = vmatprep.subr.mxu0 0.0
  %v1001 = vand.u32 %v533, 4294901760
  %v1002 = vsub.f32 %v533, %v1001
  %v1003 = vand.u32 %v1002, 4294901760
  %1004 = vmatpush1.msra.mxu0 %v1003
  %1005 = vmatprep.subr.mxu0 0.0
  %v1006 = vand.u32 %v532, 4294901760
  %v1007 = vsub.f32 %v532, %v1006
  %v1008 = vand.u32 %v1007, 4294901760
  %1009 = vmatpush1.msra.mxu0 %v1008
  %1010 = vmatprep.subr.mxu0 0.0
  %v1011 = vand.u32 %v531, 4294901760
  %v1012 = vsub.f32 %v531, %v1011
  %v1013 = vand.u32 %v1012, 4294901760
  %1014 = vmatpush1.msra.mxu0 %v1013
  %1015 = vmatprep.subr.mxu0 0.0
  %v1016 = vand.u32 %v530, 4294901760
  %v1017 = vsub.f32 %v530, %v1016
  %v1018 = vand.u32 %v1017, 4294901760
  %1019 = vmatpush1.msra.mxu0 %v1018
  %1020 = vmatprep.subr.mxu0 0.0
  %v1021 = vand.u32 %v529, 4294901760
  %v1022 = vsub.f32 %v529, %v1021
  %v1023 = vand.u32 %v1022, 4294901760
  %1024 = vmatpush1.msra.mxu0 %v1023
  %1025 = vmatprep.subr.mxu0 0.0
  %v1026 = vand.u32 %v528, 4294901760
  %v1027 = vsub.f32 %v528, %v1026
  %v1028 = vand.u32 %v1027, 4294901760
  %1029 = vmatpush1.msra.mxu0 %v1028
  %1030 = vmatprep.subr.mxu0 0.0
  %v1031 = vand.u32 %v527, 4294901760
  %v1032 = vsub.f32 %v527, %v1031
  %v1033 = vand.u32 %v1032, 4294901760
  %1034 = vmatpush1.msra.mxu0 %v1033
  %1035 = vmatprep.subr.mxu0 0.0
  %v1036 = vand.u32 %v526, 4294901760
  %v1037 = vsub.f32 %v526, %v1036
  %v1038 = vand.u32 %v1037, 4294901760
  %1039 = vmatpush1.msra.mxu0 %v1038
  %1040 = vmatprep.subr.mxu0 0.0
  %v1041 = vand.u32 %v525, 4294901760
  %v1042 = vsub.f32 %v525, %v1041
  %v1043 = vand.u32 %v1042, 4294901760
  %1044 = vmatpush1.msra.mxu0 %v1043
  %1045 = vmatprep.subr.mxu0 0.0
  %v1046 = vand.u32 %v524, 4294901760
  %v1047 = vsub.f32 %v524, %v1046
  %v1048 = vand.u32 %v1047, 4294901760
  %1049 = vmatpush1.msra.mxu0 %v1048
  %1050 = vmatprep.subr.mxu0 0.0
  %v1051 = vand.u32 %v523, 4294901760
  %v1052 = vsub.f32 %v523, %v1051
  %v1053 = vand.u32 %v1052, 4294901760
  %1054 = vmatpush1.msra.mxu0 %v1053
  %1055 = vmatprep.subr.mxu0 0.0
  %v1056 = vand.u32 %v522, 4294901760
  %v1057 = vsub.f32 %v522, %v1056
  %v1058 = vand.u32 %v1057, 4294901760
  %1059 = vmatpush1.msra.mxu0 %v1058
  %1060 = vmatprep.subr.mxu0 0.0
  %1061 = vmatpush2.msra.mxu0 0.0
  %1062 = vmatprep.subr.mxu0 0.0
  %1063 = vmatpush2.msra.mxu0 0.0
  %1064 = vmatprep.subr.mxu0 0.0
  %1065 = vmatpush2.msra.mxu0 0.0
  %1066 = vmatprep.subr.mxu0 0.0
  %1067 = vmatpush2.msra.mxu0 0.0
  %1068 = vmatprep.subr.mxu0 0.0
  %1069 = vmatpush2.msra.mxu0 0.0
  %1070 = vmatprep.subr.mxu0 0.0
  %1071 = vmatpush2.msra.mxu0 0.0
  %1072 = vmatprep.subr.mxu0 0.0
  %1073 = vmatpush2.msra.mxu0 0.0
  %1074 = vmatprep.subr.mxu0 0.0
  %1075 = vmatpush2.msra.mxu0 0.0
  %1076 = vmatprep.subr.mxu0 0.0
  %1077 = vmatpush2.msra.mxu0 0.0
  %1078 = vmatprep.subr.mxu0 0.0
  %1079 = vmatpush2.msra.mxu0 0.0
  %1080 = vmatprep.subr.mxu0 0.0
  %1081 = vmatpush2.msra.mxu0 0.0
  %1082 = vmatprep.subr.mxu0 0.0
  %1083 = vmatpush2.msra.mxu0 0.0
  %1084 = vmatprep.subr.mxu0 0.0
  %1085 = vmatpush2.msra.mxu0 0.0
  %1086 = vmatprep.subr.mxu0 0.0
  %1087 = vmatpush2.msra.mxu0 0.0
  %1088 = vmatprep.subr.mxu0 0.0
  %1089 = vmatpush2.msra.mxu0 0.0
  %1090 = vmatprep.subr.mxu0 0.0
  %1091 = vmatpush2.msra.mxu0 0.0
  %1092 = vmatprep.mubr.f32.mxu0 0.0
  %v1093 = vand.u32 %v521, 4294901760
  %1094 = vmatmul.mubr.f32.gmra.mxu0 %v1093
  %v1095 = vpop.f32.mrf.mxu0
  %v1096 = vadd.f32 %v977, %v1095
  %v1097 = vpop.f32.mrf.mxu0
  %1098 = vdwg.mxu0
  %1099 = vmatprep.subr.mxu0 0.0
  %v1100 = vand.u32 %v537, 4294901760
  %1101 = vmatpush1.msra.mxu0 %v1100
  %1102 = vmatprep.subr.mxu0 0.0
  %v1103 = vand.u32 %v536, 4294901760
  %1104 = vmatpush1.msra.mxu0 %v1103
  %1105 = vmatprep.subr.mxu0 0.0
  %v1106 = vand.u32 %v535, 4294901760
  %1107 = vmatpush1.msra.mxu0 %v1106
  %1108 = vmatprep.subr.mxu0 0.0
  %v1109 = vand.u32 %v534, 4294901760
  %1110 = vmatpush1.msra.mxu0 %v1109
  %1111 = vmatprep.subr.mxu0 0.0
  %v1112 = vand.u32 %v533, 4294901760
  %1113 = vmatpush1.msra.mxu0 %v1112
  %1114 = vmatprep.subr.mxu0 0.0
  %v1115 = vand.u32 %v532, 4294901760
  %1116 = vmatpush1.msra.mxu0 %v1115
  %1117 = vmatprep.subr.mxu0 0.0
  %v1118 = vand.u32 %v531, 4294901760
  %1119 = vmatpush1.msra.mxu0 %v1118
  %1120 = vmatprep.subr.mxu0 0.0
  %v1121 = vand.u32 %v530, 4294901760
  %1122 = vmatpush1.msra.mxu0 %v1121
  %1123 = vmatprep.subr.mxu0 0.0
  %v1124 = vand.u32 %v529, 4294901760
  %1125 = vmatpush1.msra.mxu0 %v1124
  %1126 = vmatprep.subr.mxu0 0.0
  %v1127 = vand.u32 %v528, 4294901760
  %1128 = vmatpush1.msra.mxu0 %v1127
  %1129 = vmatprep.subr.mxu0 0.0
  %v1130 = vand.u32 %v527, 4294901760
  %1131 = vmatpush1.msra.mxu0 %v1130
  %1132 = vmatprep.subr.mxu0 0.0
  %v1133 = vand.u32 %v526, 4294901760
  %1134 = vmatpush1.msra.mxu0 %v1133
  %1135 = vmatprep.subr.mxu0 0.0
  %v1136 = vand.u32 %v525, 4294901760
  %1137 = vmatpush1.msra.mxu0 %v1136
  %1138 = vmatprep.subr.mxu0 0.0
  %v1139 = vand.u32 %v524, 4294901760
  %1140 = vmatpush1.msra.mxu0 %v1139
  %1141 = vmatprep.subr.mxu0 0.0
  %v1142 = vand.u32 %v523, 4294901760
  %1143 = vmatpush1.msra.mxu0 %v1142
  %1144 = vmatprep.subr.mxu0 0.0
  %v1145 = vand.u32 %v522, 4294901760
  %1146 = vmatpush1.msra.mxu0 %v1145
  %1147 = vmatprep.subr.mxu0 0.0
  %1148 = vmatpush2.msra.mxu0 0.0
  %1149 = vmatprep.subr.mxu0 0.0
  %1150 = vmatpush2.msra.mxu0 0.0
  %1151 = vmatprep.subr.mxu0 0.0
  %1152 = vmatpush2.msra.mxu0 0.0
  %1153 = vmatprep.subr.mxu0 0.0
  %1154 = vmatpush2.msra.mxu0 0.0
  %1155 = vmatprep.subr.mxu0 0.0
  %1156 = vmatpush2.msra.mxu0 0.0
  %1157 = vmatprep.subr.mxu0 0.0
  %1158 = vmatpush2.msra.mxu0 0.0
  %1159 = vmatprep.subr.mxu0 0.0
  %1160 = vmatpush2.msra.mxu0 0.0
  %1161 = vmatprep.subr.mxu0 0.0
  %1162 = vmatpush2.msra.mxu0 0.0
  %1163 = vmatprep.subr.mxu0 0.0
  %1164 = vmatpush2.msra.mxu0 0.0
  %1165 = vmatprep.subr.mxu0 0.0
  %1166 = vmatpush2.msra.mxu0 0.0
  %1167 = vmatprep.subr.mxu0 0.0
  %1168 = vmatpush2.msra.mxu0 0.0
  %1169 = vmatprep.subr.mxu0 0.0
  %1170 = vmatpush2.msra.mxu0 0.0
  %1171 = vmatprep.subr.mxu0 0.0
  %1172 = vmatpush2.msra.mxu0 0.0
  %1173 = vmatprep.subr.mxu0 0.0
  %1174 = vmatpush2.msra.mxu0 0.0
  %1175 = vmatprep.subr.mxu0 0.0
  %1176 = vmatpush2.msra.mxu0 0.0
  %1177 = vmatprep.subr.mxu0 0.0
  %1178 = vmatpush2.msra.mxu0 0.0
  %1179 = vmatprep.mubr.f32.mxu0 0.0
  %v1180 = vand.u32 %v521, 4294901760
  %1181 = vmatmul.mubr.f32.gmra.mxu0 %v1180
  %v1182 = vpop.f32.mrf.mxu0
  %v1183 = vadd.f32 %v1096, %v1182
  %v1184 = vpop.f32.mrf.mxu0
  %1185 = vdwg.mxu0
  %vm1186 = vcmask 64512
  %1187 = vst.msk [vmem:[%s5] sm:$0xff] %vm1186, %v1183
  // Predicated region
  $region22: #{critic_forward.1} parent=0 // pred_check
    _
  $region23: #{critic_forward.1} parent=0 // pred_check_branch
    %1189 = sbr.rel (0) target = $region25
  $region24: #{critic_forward.1} parent=0 // pred_region
    _
  $region25: #{critic_forward.1} parent=0 // pred_fallthru
    _
  // Predicated region
  $region26: #{critic_forward.1} parent=0 // pred_check
    _
  $region27: #{critic_forward.1} parent=0 // pred_check_branch
    %1191 = sbr.rel (0) target = $region29
  $region28: #{critic_forward.1} parent=0 // pred_region
    _
  $region29: #{critic_forward.1} parent=0 // pred_fallthru
    _

</llo_original>
